<compile_context>
chip_gen: v7x
topology: tpu7x:2x2x1
jax: 0.10.0
libtpu: 0.0.40
codegen_flags: <defaults>
</compile_context>

<pallas_src>
import jax
import jax.numpy as jnp
from jax.experimental import pallas as pl
from jax.experimental.pallas import tpu as pltpu


def _pg_kernel(x_ref, w1_ref, b1_ref, w2_ref, b2_ref, o_ref):
    # Hidden layer: cast streamed activations to bf16 in-kernel (VPU), f32 MXU acc.
    x = x_ref[...].astype(jnp.bfloat16)
    h = jnp.dot(x, w1_ref[...], preferred_element_type=jnp.float32)
    h = h + b1_ref[...]                       # bias in f32, broadcast over batch
    # LeakyReLU (PyTorch default negative_slope = 0.01), f32
    h = jnp.where(h >= 0, h, 0.01 * h)
    # Output layer: (tb, 128)bf16 @ (128, act)bf16 -> f32 accumulate
    logits = jnp.dot(h.astype(w2_ref.dtype), w2_ref[...],
                     preferred_element_type=jnp.float32)
    logits = logits + b2_ref[...]
    # Numerically stable softmax over dim=1; exact normalization so rows sum to 1.
    m = jnp.max(logits, axis=1, keepdims=True)
    e = jnp.exp(logits - m)
    denom = jnp.sum(e, axis=1, keepdims=True)
    o_ref[...] = (e / denom).astype(o_ref.dtype)


def pg_forward(x, w1, b1, w2, b2, *, tile_b=4096):
    """x: (B, obs); w1: (obs, 128); b1: (1, 128); w2: (128, act); b2: (1, act)."""
    B, obs = x.shape
    hidden = w1.shape[1]
    act = w2.shape[1]

    # Weight/bias casts are tiny; keep them in the wrapper. x is NOT pre-cast.
    w1_bf = w1.astype(jnp.bfloat16)
    w2_bf = w2.astype(jnp.bfloat16)
    b1_f = b1.astype(jnp.float32).reshape(1, hidden)
    b2_f = b2.astype(jnp.float32).reshape(1, act)

    # Batch tile: multiple of 8 sublanes, capped at tile_b. For medium/large
    # batches force ~4 grid steps (floor 256) so ("parallel",) can shard across
    # both TensorCores on v7x. Ragged grid -> no padded copy of x.
    B_r8 = ((B + 7) // 8) * 8
    tb = min(int(tile_b), B_r8)
    if B_r8 >= 512:
        tb = min(tb, max(256, ((B_r8 // 4 + 7) // 8) * 8))
    tb = max(8, (tb // 8) * 8)
    grid = (pl.cdiv(B, tb),)

    # VMEM budget: x double-buffer + narrow out double-buffer + resident bf16
    # weights + f32 intermediates (h / logits / e) with slack. Capped at 64 MiB
    # (v7x physical per-core VMEM).
    vmem_est = (2 * tb * obs * x.dtype.itemsize
                + 2 * tb * act * 4
                + (obs * hidden + hidden * act) * 2
                + (hidden + act) * 4
                + 4 * tb * hidden * 4)
    vmem_limit = int(min(64 * 1024 * 1024, max(16 * 1024 * 1024, 2 * vmem_est)))

    cost = pl.CostEstimate(
        flops=2 * B * (obs * hidden + hidden * act),
        transcendentals=B * act,
        bytes_accessed=(B * obs * x.dtype.itemsize
                        + (obs * hidden + hidden * act) * 2
                        + (hidden + act) * 4
                        + B * act * 4),
    )

    return pl.pallas_call(
        _pg_kernel,
        out_shape=jax.ShapeDtypeStruct((B, act), jnp.float32),
        grid=grid,
        in_specs=[
            pl.BlockSpec((tb, obs), lambda i: (i, 0)),       # x: streamed per tile
            pl.BlockSpec((obs, hidden), lambda i: (0, 0)),   # W1: resident
            pl.BlockSpec((1, hidden), lambda i: (0, 0)),     # b1: resident
            pl.BlockSpec((hidden, act), lambda i: (0, 0)),   # W2: resident
            pl.BlockSpec((1, act), lambda i: (0, 0)),        # b2: resident
        ],
        out_specs=pl.BlockSpec((tb, act), lambda i: (i, 0)),
        compiler_params=pltpu.CompilerParams(
            dimension_semantics=("parallel",),
            vmem_limit_bytes=vmem_limit,
        ),
        cost_estimate=cost,
    )(x, w1_bf, b1_f, w2_bf, b2_f)


def init_pg_params(key, observation_size, action_size, hidden=128):
    """Deterministic init mimicking nn.Linear default U[-1/sqrt(fan_in), 1/sqrt(fan_in)]."""
    k1, k2, k3, k4 = jax.random.split(key, 4)
    lim1 = 1.0 / jnp.sqrt(jnp.float32(observation_size))
    lim2 = 1.0 / jnp.sqrt(jnp.float32(hidden))
    w1 = jax.random.uniform(k1, (observation_size, hidden), jnp.float32, -lim1, lim1)
    b1 = jax.random.uniform(k2, (1, hidden), jnp.float32, -lim1, lim1)
    w2 = jax.random.uniform(k3, (hidden, action_size), jnp.float32, -lim2, lim2)
    b2 = jax.random.uniform(k4, (1, action_size), jnp.float32, -lim2, lim2)
    return w1, b1, w2, b2


def _reference(x, w1, b1, w2, b2):
    h = x @ w1 + b1
    h = jnp.where(h >= 0, h, 0.01 * h)
    logits = h @ w2 + b2
    return jax.nn.softmax(logits, axis=1)


if __name__ == "__main__":
    observation_size = 32
    action_size = 8

    key = jax.random.PRNGKey(0)
    kx, kp, kx2, kx3 = jax.random.split(key, 4)
    w1, b1, w2, b2 = init_pg_params(kp, observation_size, action_size)

    # Case 1: tiny batch (single tile, grid=(1,))
    batch = 8
    x = jax.random.normal(kx, (batch, observation_size), jnp.float32)
    out = jax.block_until_ready(pg_forward(x, w1, b1, w2, b2))
    ref = _reference(x, w1, b1, w2, b2)
    assert out.shape == (batch, action_size)
    assert jnp.allclose(out, ref, atol=1e-2, rtol=0), "mismatch vs f32 reference (tiny batch)"
    assert jnp.allclose(jnp.sum(out, axis=1), 1.0, atol=2e-3), "rows do not sum to ~1"

    # Case 2: batch not a multiple of the tile -> multi-step grid + ragged last block
    batch2 = 100
    x2 = jax.random.normal(kx2, (batch2, observation_size), jnp.float32)
    out2 = jax.block_until_ready(pg_forward(x2, w1, b1, w2, b2, tile_b=8))
    ref2 = _reference(x2, w1, b1, w2, b2)
    assert out2.shape == (batch2, action_size)
    assert jnp.allclose(out2, ref2, atol=1e-2, rtol=0), "mismatch vs f32 reference (tiled batch)"
    assert jnp.allclose(jnp.sum(out2, axis=1), 1.0, atol=2e-3), "rows do not sum to ~1"

    # Case 3: default tile path with auto-split into multiple grid steps
    batch3 = 600
    x3 = jax.random.normal(kx3, (batch3, observation_size), jnp.float32)
    out3 = jax.block_until_ready(pg_forward(x3, w1, b1, w2, b2))
    ref3 = _reference(x3, w1, b1, w2, b2)
    assert out3.shape == (batch3, action_size)
    assert jnp.allclose(out3, ref3, atol=1e-2, rtol=0), "mismatch vs f32 reference (auto-split)"
    assert jnp.allclose(jnp.sum(out3, axis=1), 1.0, atol=2e-3), "rows do not sum to ~1"

    print("KERNEL_OK")
</pallas_src>

<mosaic_0001>
module attributes {stable_mosaic.version = 11 : i64} {
  func.func @_pg_kernel(%arg0: i32, %arg1: memref<8x32xf32, #tpu.memory_space<vmem>>, %arg2: memref<32x128xbf16, #tpu.memory_space<vmem>>, %arg3: memref<1x128xf32, #tpu.memory_space<vmem>>, %arg4: memref<128x8xbf16, #tpu.memory_space<vmem>>, %arg5: memref<1x8xf32, #tpu.memory_space<vmem>>, %arg6: memref<8x8xf32, #tpu.memory_space<vmem>>) attributes {dimension_semantics = [#tpu.dimension_semantics<parallel>], iteration_bounds = array<i64: 1>, scalar_prefetch = 0 : i64, scratch_operands = 0 : i64, tpu.core_type = #tpu.core_type<tc>, window_params = [{transform_indices = @transform_0, window_bounds = array<i64: 8, 32>}, {pipeline_mode = #tpu.pipeline_mode<synchronous>, transform_indices = @transform_1, window_bounds = array<i64: 32, 128>}, {pipeline_mode = #tpu.pipeline_mode<synchronous>, transform_indices = @transform_2, window_bounds = array<i64: 1, 128>}, {pipeline_mode = #tpu.pipeline_mode<synchronous>, transform_indices = @transform_3, window_bounds = array<i64: 128, 8>}, {pipeline_mode = #tpu.pipeline_mode<synchronous>, transform_indices = @transform_4, window_bounds = array<i64: 1, 8>}, {transform_indices = @transform_5, window_bounds = array<i64: 8, 8>}]} {
    %c0 = arith.constant 0 : index
    %c0_0 = arith.constant 0 : index
    %0 = vector.load %arg1[%c0, %c0_0] : memref<8x32xf32, #tpu.memory_space<vmem>>, vector<8x32xf32>
    %1 = arith.truncf %0 : vector<8x32xf32> to vector<8x32xbf16>
    %c0_1 = arith.constant 0 : index
    %c0_2 = arith.constant 0 : index
    %2 = vector.load %arg2[%c0_1, %c0_2] : memref<32x128xbf16, #tpu.memory_space<vmem>>, vector<32x128xbf16>
    %cst = arith.constant dense<0.000000e+00> : vector<8x128xf32>
    %3 = tpu.matmul %1, %2, %cst {dimension_numbers = #tpu.dot_dimension_numbers<[1], [0], [0], [1], [0, 0, 1, 1], [], []>} : vector<8x32xbf16>, vector<32x128xbf16>, vector<8x128xf32> -> vector<8x128xf32>
    %c0_3 = arith.constant 0 : index
    %c0_4 = arith.constant 0 : index
    %4 = vector.load %arg3[%c0_3, %c0_4] : memref<1x128xf32, #tpu.memory_space<vmem>>, vector<1x128xf32>
    %5 = vector.broadcast %4 : vector<1x128xf32> to vector<8x128xf32>
    %6 = arith.addf %3, %5 : vector<8x128xf32>
    %cst_5 = arith.constant 0.000000e+00 : f32
    %7 = vector.broadcast %cst_5 : f32 to vector<8x128xf32>
    %8 = arith.cmpf oge, %6, %7 : vector<8x128xf32>
    %cst_6 = arith.constant 0.00999999977 : f32
    %9 = vector.broadcast %cst_6 : f32 to vector<8x128xf32>
    %10 = arith.mulf %9, %6 : vector<8x128xf32>
    %11 = arith.select %8, %6, %10 : vector<8x128xi1>, vector<8x128xf32>
    %12 = arith.truncf %11 : vector<8x128xf32> to vector<8x128xbf16>
    %c0_7 = arith.constant 0 : index
    %c0_8 = arith.constant 0 : index
    %13 = vector.load %arg4[%c0_7, %c0_8] : memref<128x8xbf16, #tpu.memory_space<vmem>>, vector<128x8xbf16>
    %cst_9 = arith.constant dense<0.000000e+00> : vector<8x8xf32>
    %14 = tpu.matmul %12, %13, %cst_9 {dimension_numbers = #tpu.dot_dimension_numbers<[1], [0], [0], [1], [0, 0, 1, 1], [], []>} : vector<8x128xbf16>, vector<128x8xbf16>, vector<8x8xf32> -> vector<8x8xf32>
    %c0_10 = arith.constant 0 : index
    %c0_11 = arith.constant 0 : index
    %15 = vector.load %arg5[%c0_10, %c0_11] : memref<1x8xf32, #tpu.memory_space<vmem>>, vector<1x8xf32>
    %16 = vector.broadcast %15 : vector<1x8xf32> to vector<8x8xf32>
    %17 = arith.addf %14, %16 : vector<8x8xf32>
    %cst_12 = arith.constant dense<0xFF800000> : vector<8xf32>
    %18 = vector.multi_reduction <maximumf>, %17, %cst_12 [1] : vector<8x8xf32> to vector<8xf32>
    %19 = vector.shape_cast %18 : vector<8xf32> to vector<8x1xf32>
    %20 = vector.broadcast %19 : vector<8x1xf32> to vector<8x8xf32>
    %21 = arith.subf %17, %20 : vector<8x8xf32>
    %22 = math.exp %21 : vector<8x8xf32>
    %cst_13 = arith.constant dense<0.000000e+00> : vector<8xf32>
    %23 = vector.multi_reduction <add>, %22, %cst_13 [1] : vector<8x8xf32> to vector<8xf32>
    %24 = vector.shape_cast %23 : vector<8xf32> to vector<8x1xf32>
    %25 = vector.broadcast %24 : vector<8x1xf32> to vector<8x8xf32>
    %26 = arith.divf %22, %25 : vector<8x8xf32>
    %c0_14 = arith.constant 0 : index
    %c0_15 = arith.constant 0 : index
    %27 = vector.load %arg6[%c0_14, %c0_15] : memref<8x8xf32, #tpu.memory_space<vmem>>, vector<8x8xf32>
    tpu.vector_store %arg6[%c0_14, %c0_15], %26 {strides = array<i32>} : memref<8x8xf32, #tpu.memory_space<vmem>>, vector<8x8xf32>,
    return
  }
  func.func @transform_0(%arg0: i32) -> (i32, i32) {
    %c0_i32 = arith.constant 0 : i32
    %c0_i32_0 = arith.constant 0 : i32
    return %arg0, %c0_i32 : i32, i32
  }
  func.func @transform_1(%arg0: i32) -> (i32, i32) {
    %c0_i32 = arith.constant 0 : i32
    %c0_i32_0 = arith.constant 0 : i32
    %c0_i32_1 = arith.constant 0 : i32
    return %c0_i32, %c0_i32_0 : i32, i32
  }
  func.func @transform_2(%arg0: i32) -> (i32, i32) {
    %c0_i32 = arith.constant 0 : i32
    %c0_i32_0 = arith.constant 0 : i32
    %c0_i32_1 = arith.constant 0 : i32
    return %c0_i32, %c0_i32_0 : i32, i32
  }
  func.func @transform_3(%arg0: i32) -> (i32, i32) {
    %c0_i32 = arith.constant 0 : i32
    %c0_i32_0 = arith.constant 0 : i32
    %c0_i32_1 = arith.constant 0 : i32
    return %c0_i32, %c0_i32_0 : i32, i32
  }
  func.func @transform_4(%arg0: i32) -> (i32, i32) {
    %c0_i32 = arith.constant 0 : i32
    %c0_i32_0 = arith.constant 0 : i32
    %c0_i32_1 = arith.constant 0 : i32
    return %c0_i32, %c0_i32_0 : i32, i32
  }
  func.func @transform_5(%arg0: i32) -> (i32, i32) {
    %c0_i32 = arith.constant 0 : i32
    %c0_i32_0 = arith.constant 0 : i32
    return %arg0, %c0_i32 : i32, i32
  }
}

</mosaic_0001>

<llo_original>
// kernel: tpu_custom_call.1
$region0: #{tpu_custom_call.1}
  #allocation0 [shape = 'u32[]', space=smem, size = 0x4, offset = 0x4, fixed_abs, tag = 'smem constant byte address 0x4 - core index']
  #allocation1 [shape = 'u32[144,128]{1,0:T(1,128)}', space=vmem, size = 0x12000, scoped, tag = 'internal scratch']
  %s0 = inlined_call_operand.vmem [shape: f32[8,32], index: 0, kind: input, shape index: {}]
  %s1 = inlined_call_operand.vmem [shape: bf16[32,128], index: 1, kind: input, shape index: {}]
  %s2 = inlined_call_operand.vmem [shape: f32[1,128], index: 2, kind: input, shape index: {}]
  %s3 = inlined_call_operand.vmem [shape: bf16[128,8], index: 3, kind: input, shape index: {}]
  %s4 = inlined_call_operand.vmem [shape: f32[1,8], index: 4, kind: input, shape index: {}]
  %s5 = inlined_call_operand.hbm [shape: f32[8,8], index: 5, kind: output, shape index: {}]
  %s6 = sld [smem:[#allocation0]]
  $region30: #{tpu_custom_call.1} parent=0
    _
  %s8 = ssub.s32 1, %s6
  %s9 = scalar_select 0, %s8, %s6
  $region1: #{tpu_custom_call.1} parent=0
    #allocation2 [shape = 'u8[4096]{0}', space=vmem, size = 0x1000, scoped, tag = 'output window, operand 0, single buffered']
    #allocation3 [shape = 's32[1]{0}', space=sflag, size = 0x4, scoped, tag = 'scoped memory for tpu_custom_call.1']
    %10 = vsyncpa [#allocation3], 0
    // Predicated region
    $region2: #{tpu_custom_call.1} parent=1 // pred_check
      _
    $region3: #{tpu_custom_call.1} parent=1 // pred_check_branch
      %12 = sbr.rel (0) target = $region5
    $region4: #{tpu_custom_call.1} parent=1 // pred_region
      _
    $region5: #{tpu_custom_call.1} parent=1 // pred_fallthru
      _
    // Predicated region
    $region6: #{tpu_custom_call.1} parent=1 // pred_check
      _
    $region7: #{tpu_custom_call.1} parent=1 // pred_check_branch
      %14 = sbr.rel (0) target = $region9
    $region8: #{tpu_custom_call.1} parent=1 // pred_region
      _
    $region9: #{tpu_custom_call.1} parent=1 // pred_fallthru
      _
    // Predicated region
    $region10: #{tpu_custom_call.1} parent=1 // pred_check
      _
    $region11: #{tpu_custom_call.1} parent=1 // pred_check_branch
      %16 = sbr.rel (0) target = $region13
    $region12: #{tpu_custom_call.1} parent=1 // pred_region
      _
    $region13: #{tpu_custom_call.1} parent=1 // pred_fallthru
      _
    // Predicated region
    $region14: #{tpu_custom_call.1} parent=1 // pred_check
      _
    $region15: #{tpu_custom_call.1} parent=1 // pred_check_branch
      %18 = sbr.rel (0) target = $region17
    $region16: #{tpu_custom_call.1} parent=1 // pred_region
      _
    $region17: #{tpu_custom_call.1} parent=1 // pred_fallthru
      _
    // Predicated region
    $region18: #{tpu_custom_call.1} parent=1 // pred_check
      _
    $region19: #{tpu_custom_call.1} parent=1 // pred_check_branch
      %20 = sbr.rel (0) target = $region21
    $region20: #{tpu_custom_call.1} parent=1 // pred_region
      _
    $region21: #{tpu_custom_call.1} parent=1 // pred_fallthru
      _
    %v22 = vld [vmem:[%s0] sm:$0xff]
    %v23 = vpack.c.bf16 %v22, %v22
    %v24 = vld [vmem:[%s1] sm:$0xf]
    %v25 = vld [vmem:[%s1 + $0x4] sm:$0xf]
    %v26 = vld [vmem:[%s1 + $0x8] sm:$0xf]
    %v27 = vld [vmem:[%s1 + $0xc] sm:$0xf]
    %v28 = vld [vmem:[%s2] sm:$0x1]
    %v30 = vlaneseq
    %v31 = vshrl.u32 %v30, 7
    %v32 = vsub.s32 0, %v31
    %v33 = vrot.slane %v28, %v32
    %v39 = vunpack.c.l.b16 %v24
    %v40 = vunpack.c.l.b16 %v25
    %v41 = vunpack.c.l.b16 %v26
    %v42 = vunpack.c.l.b16 %v27
    %v43 = vpack.c.b16 %v40, %v39
    %v44 = vpack.c.b16 %v42, %v41
    %vm47 = vcmask 261120
    %v49 = vsel %vm47, %v23, 0
    %51 = vmatprep.subr.bf16.mxu0 0
    %52 = vmatpush1.bf16.msra.mxu0 %v43
    %53 = vmatprep.subr.bf16.mxu0 0
    %54 = vmatpush1.bf16.msra.mxu0 %v44
    %55 = vmatprep.subr.bf16.mxu0 0
    %56 = vmatpush1.bf16.msra.mxu0 0
    %57 = vmatprep.subr.bf16.mxu0 0
    %58 = vmatpush1.bf16.msra.mxu0 0
    %59 = vmatprep.subr.bf16.mxu0 0
    %60 = vmatpush1.bf16.msra.mxu0 0
    %61 = vmatprep.subr.bf16.mxu0 0
    %62 = vmatpush1.bf16.msra.mxu0 0
    %63 = vmatprep.subr.bf16.mxu0 0
    %64 = vmatpush1.bf16.msra.mxu0 0
    %65 = vmatprep.subr.bf16.mxu0 0
    %66 = vmatpush1.bf16.msra.mxu0 0
    %67 = vmatprep.subr.bf16.mxu0 0
    %68 = vmatpush1.bf16.msra.mxu0 0
    %69 = vmatprep.subr.bf16.mxu0 0
    %70 = vmatpush1.bf16.msra.mxu0 0
    %71 = vmatprep.subr.bf16.mxu0 0
    %72 = vmatpush1.bf16.msra.mxu0 0
    %73 = vmatprep.subr.bf16.mxu0 0
    %74 = vmatpush1.bf16.msra.mxu0 0
    %75 = vmatprep.subr.bf16.mxu0 0
    %76 = vmatpush1.bf16.msra.mxu0 0
    %77 = vmatprep.subr.bf16.mxu0 0
    %78 = vmatpush1.bf16.msra.mxu0 0
    %79 = vmatprep.subr.bf16.mxu0 0
    %80 = vmatpush1.bf16.msra.mxu0 0
    %81 = vmatprep.subr.bf16.mxu0 0
    %82 = vmatpush1.bf16.msra.mxu0 0
    %83 = vmatprep.mubr.bf16.mxu0 0
    %84 = vmatmul.mubr.bf16.gmra.mrb[0].mxu0 %v49
    %v85 = vpop.f32.mrb[0].mxu0
    %v86 = vadd.f32 %v33, %v85
    %v87 = vpop.f32.mrb[0].mxu0
    %v88 = vpop.f32.mrb[0].mxu0
    %v89 = vpop.f32.mrb[0].mxu0
    %90 = vdwg.mxu0
    %vm91 = vcmp.ge.f32.partialorder %v86, 0.0
    %v92 = vmul.f32 %v86, 0.01
    %v93 = vsel %vm91, %v86, %v92
    %v94 = vpack.c.bf16 %v93, %v93
    %v95 = vld [vmem:[%s3] sm:$0xf]
    %v96 = vld [vmem:[%s3 + $0x4] sm:$0xf]
    %v97 = vld [vmem:[%s3 + $0x8] sm:$0xf]
    %v98 = vld [vmem:[%s3 + $0xc] sm:$0xf]
    %v99 = vld [vmem:[%s3 + $0x10] sm:$0xf]
    %v100 = vld [vmem:[%s3 + $0x14] sm:$0xf]
    %v101 = vld [vmem:[%s3 + $0x18] sm:$0xf]
    %v102 = vld [vmem:[%s3 + $0x1c] sm:$0xf]
    %v103 = vld [vmem:[%s3 + $0x20] sm:$0xf]
    %v104 = vld [vmem:[%s3 + $0x24] sm:$0xf]
    %v105 = vld [vmem:[%s3 + $0x28] sm:$0xf]
    %v106 = vld [vmem:[%s3 + $0x2c] sm:$0xf]
    %v107 = vld [vmem:[%s3 + $0x30] sm:$0xf]
    %v108 = vld [vmem:[%s3 + $0x34] sm:$0xf]
    %v109 = vld [vmem:[%s3 + $0x38] sm:$0xf]
    %v110 = vld [vmem:[%s3 + $0x3c] sm:$0xf]
    %v111 = vld [vmem:[%s4] sm:$0x1]
    %v113 = vlaneseq
    %v114 = vshrl.u32 %v113, 7
    %v115 = vsub.s32 0, %v114
    %v116 = vrot.slane %v111, %v115
    %v134 = vunpack.c.l.b16 %v95
    %v135 = vunpack.c.l.b16 %v96
    %v136 = vunpack.c.l.b16 %v97
    %v137 = vunpack.c.l.b16 %v98
    %v138 = vunpack.c.l.b16 %v99
    %v139 = vunpack.c.l.b16 %v100
    %v140 = vunpack.c.l.b16 %v101
    %v141 = vunpack.c.l.b16 %v102
    %v142 = vunpack.c.l.b16 %v103
    %v143 = vunpack.c.l.b16 %v104
    %v144 = vunpack.c.l.b16 %v105
    %v145 = vunpack.c.l.b16 %v106
    %v146 = vunpack.c.l.b16 %v107
    %v147 = vunpack.c.l.b16 %v108
    %v148 = vunpack.c.l.b16 %v109
    %v149 = vunpack.c.l.b16 %v110
    %v150 = vpack.c.b16 %v135, %v134
    %v151 = vpack.c.b16 %v137, %v136
    %v152 = vpack.c.b16 %v139, %v138
    %v153 = vpack.c.b16 %v141, %v140
    %v154 = vpack.c.b16 %v143, %v142
    %v155 = vpack.c.b16 %v145, %v144
    %v156 = vpack.c.b16 %v147, %v146
    %v157 = vpack.c.b16 %v149, %v148
    %166 = vmatprep.subr.bf16.mxu0 0
    %167 = vmatpush1.bf16.msra.mxu0 %v150
    %168 = vmatprep.subr.bf16.mxu0 0
    %169 = vmatpush1.bf16.msra.mxu0 %v151
    %170 = vmatprep.subr.bf16.mxu0 0
    %171 = vmatpush1.bf16.msra.mxu0 %v152
    %172 = vmatprep.subr.bf16.mxu0 0
    %173 = vmatpush1.bf16.msra.mxu0 %v153
    %174 = vmatprep.subr.bf16.mxu0 0
    %175 = vmatpush1.bf16.msra.mxu0 %v154
    %176 = vmatprep.subr.bf16.mxu0 0
    %177 = vmatpush1.bf16.msra.mxu0 %v155
    %178 = vmatprep.subr.bf16.mxu0 0
    %179 = vmatpush1.bf16.msra.mxu0 %v156
    %180 = vmatprep.subr.bf16.mxu0 0
    %181 = vmatpush1.bf16.msra.mxu0 %v157
    %182 = vmatprep.subr.bf16.mxu0 0
    %183 = vmatpush1.bf16.msra.mxu0 0
    %184 = vmatprep.subr.bf16.mxu0 0
    %185 = vmatpush1.bf16.msra.mxu0 0
    %186 = vmatprep.subr.bf16.mxu0 0
    %187 = vmatpush1.bf16.msra.mxu0 0
    %188 = vmatprep.subr.bf16.mxu0 0
    %189 = vmatpush1.bf16.msra.mxu0 0
    %190 = vmatprep.subr.bf16.mxu0 0
    %191 = vmatpush1.bf16.msra.mxu0 0
    %192 = vmatprep.subr.bf16.mxu0 0
    %193 = vmatpush1.bf16.msra.mxu0 0
    %194 = vmatprep.subr.bf16.mxu0 0
    %195 = vmatpush1.bf16.msra.mxu0 0
    %196 = vmatprep.subr.bf16.mxu0 0
    %197 = vmatpush1.bf16.msra.mxu0 0
    %198 = vmatprep.mubr.bf16.mxu0 0
    %199 = vmatmul.mubr.bf16.gmra.mrb[0].mxu0 %v94
    %v200 = vpop.f32.mrb[0].mxu0
    %v201 = vadd.f32 %v116, %v200
    %v202 = vpop.f32.mrb[0].mxu0
    %v203 = vpop.f32.mrb[0].mxu0
    %v204 = vpop.f32.mrb[0].mxu0
    %205 = vdwg.mxu0
    %vm206 = vcmask 64512
    %v207 = vsel %vm206, %v201, -inf
    %208 = vmax.xlane.f32.xlu0 %v207
    %v209 = vpop.xlane.xlu0 %208
    %v210 = vsub.f32 %v201, %v209
    %v211 = vmul.f32 %v210, 1.442695
    %v212 = vpow.pop %v211
    %v213 = vsel %vm206, %v212, 0.0
    %214 = vadd.xlane.f32.xlu0 %v213
    %v215 = vpop.xlane.xlu0 %214
    %v216 = vrcp.pop %v215
    %v217 = vmul.f32 %v212, %v216
    %218 = vst.msk [vmem:[#allocation2] sm:$0xff] %vm206, %v217
    // Predicated region
    $region22: #{tpu_custom_call.1} parent=1 // pred_check
      _
    $region23: #{tpu_custom_call.1} parent=1 // pred_check_branch
      %220 = sbr.rel (0) target = $region25
    $region24: #{tpu_custom_call.1} parent=1 // pred_region
      %s222 = ssub.s32 128, 128
      %223 = vsyncadd [#allocation3], %s222
      %s225 = sshll.u32 [#allocation2], 4
      %s226 = int_to_ptr.vmem [resolvable:$true] %s225
      %228 = dma.vmem_to_hbm [thread:$0]  %s226, 128, %s5, [#allocation3]
    $region25: #{tpu_custom_call.1} parent=1 // pred_fallthru
      _
    // Predicated region
    $region26: #{tpu_custom_call.1} parent=1 // pred_check
      _
    $region27: #{tpu_custom_call.1} parent=1 // pred_check_branch
      %230 = sbr.rel (0) target = $region29
    $region28: #{tpu_custom_call.1} parent=1 // pred_region
      %231 = dma.done [#allocation3], 128
    $region29: #{tpu_custom_call.1} parent=1 // pred_fallthru
      _
    %232 = vsyncpa [#allocation3], 1

</llo_original>
